<compile_context>
chip_gen: v7x
topology: tpu7x:2x2x1
jax: 0.10.0
libtpu: 0.0.40
codegen_flags: <defaults>
</compile_context>

<pallas_src>
import jax
import jax.numpy as jnp
from jax.experimental import pallas as pl
from jax.experimental.pallas import tpu as pltpu

EPS = 1e-5  # nn.InstanceNorm2d default eps


def contracting_block_kernel(p_ref, w_ref, o_ref):
    """One batch sample per grid step.

    p_ref: (1, K, S) bf16     im2col patches (K = C_in*KH*KW, S = H_out*W_out)
    w_ref: (C_out, K) bf16    conv weights (VMEM-resident across the grid)
    o_ref: (1, C_out, S) f32  normalized + ReLU'd output, channels-first
    """
    # Conv as a single MXU matmul with f32 accumulation -> (C_out, S).
    y = jnp.dot(w_ref[...], p_ref[0], preferred_element_type=jnp.float32)
    # InstanceNorm2d (affine=False): per-channel stats over the spatial (lane) axis.
    # The conv bias is omitted on purpose: the mean subtraction cancels it exactly.
    mean = jnp.mean(y, axis=1, keepdims=True)
    d = y - mean
    var = jnp.mean(d * d, axis=1, keepdims=True)
    # ReLU, store in f32, channels-first (reshapes straight to NCHW in the wrapper).
    o_ref[0] = jnp.maximum(d * jax.lax.rsqrt(var + EPS), 0.0).astype(o_ref.dtype)


def contracting_block(x, w, b=None, *, stride=2, padding=1):
    """x: (N, C_in, H, W) f32; w: (C_out, C_in, KH, KW) PyTorch conv layout; b: (C_out,)
    (accepted for API parity but unused: a per-channel bias is cancelled by
    InstanceNorm2d's mean subtraction).  Returns (N, C_out, H_out, W_out) matching
    Conv2d(padding_mode='reflect', stride=2) -> InstanceNorm2d -> ReLU."""
    del b  # mathematically a no-op under InstanceNorm(affine=False)
    N, C_in, H, W = x.shape
    C_out, _, KH, KW = w.shape
    H_out = (H + 2 * padding - KH) // stride + 1
    W_out = (W + 2 * padding - KW) // stride + 1
    S = H_out * W_out
    K = C_in * KH * KW

    # ---- wrapper-side layout plumbing: reflect pad + im2col (K unpadded, bf16) ----
    xp = jnp.pad(x, ((0, 0), (0, 0), (padding, padding), (padding, padding)),
                 mode="reflect")
    cols = []
    for di in range(KH):
        for dj in range(KW):
            cols.append(xp[:, :, di:di + stride * H_out:stride,
                           dj:dj + stride * W_out:stride])
    # (N, C_in, KH*KW, H_out, W_out) -> (N, K, S); k = ci*KH*KW + di*KW + dj matches
    # w.reshape(C_out, K), so neither operand needs a transpose.
    patches = jnp.stack(cols, axis=2).reshape(N, K, S).astype(jnp.bfloat16)
    w_mat = w.reshape(C_out, K).astype(jnp.bfloat16)

    # VMEM budget: double-buffered per-sample tiles + resident weights + in-kernel f32
    # intermediates; cap against the chip's physical VMEM (v7x only has 64 MiB).
    tile_bytes = (2 * K * S * 2            # patch tile (bf16, double-buffered)
                  + 2 * C_out * K * 2      # weights (double-buffered by default)
                  + 2 * C_out * S * 4      # output tile (f32, double-buffered)
                  + 3 * C_out * S * 4)     # y / centered / stats f32 intermediates
    try:
        vmem_phys = pltpu.get_tpu_info().vmem_capacity_bytes
    except Exception:
        vmem_phys = 64 << 20
    vmem_bytes = int(min(max(tile_bytes + (2 << 20), 4 << 20), int(vmem_phys * 0.7)))

    out = pl.pallas_call(
        contracting_block_kernel,
        out_shape=jax.ShapeDtypeStruct((N, C_out, S), jnp.float32),
        grid_spec=pltpu.PrefetchScalarGridSpec(
            num_scalar_prefetch=0,
            grid=(N,),
            in_specs=[
                pl.BlockSpec((1, K, S), lambda n: (n, 0, 0)),    # pipelined per sample
                pl.BlockSpec((C_out, K), lambda n: (0, 0)),      # resident weights
            ],
            out_specs=pl.BlockSpec((1, C_out, S), lambda n: (n, 0, 0)),
        ),
        compiler_params=pltpu.CompilerParams(
            dimension_semantics=("parallel",),  # megacore sharding; free on 1-TC chips
            vmem_limit_bytes=vmem_bytes,
        ),
    )(patches, w_mat)

    # Channels-first output: plain reshape, no transpose, no padding to strip.
    return out.reshape(N, C_out, H_out, W_out)


if __name__ == "__main__":
    # ContractingBlock(c_in=4) default config: c_out = 2*c_in, k=3, s=2, p=1 reflect,
    # InstanceNorm2d, ReLU.  Input (N, C_in, H, W) -> output (N, 2*C_in, H/2, W/2).
    N, C_in, H, W = 2, 4, 16, 16
    C_out = 2 * C_in

    key = jax.random.PRNGKey(0)
    kx, kw, kb = jax.random.split(key, 3)
    x = jax.random.normal(kx, (N, C_in, H, W), dtype=jnp.float32)
    fan_in = C_in * 3 * 3
    bound = 1.0 / (fan_in ** 0.5)                 # PyTorch Conv2d default init
    w = jax.random.uniform(kw, (C_out, C_in, 3, 3), jnp.float32, -bound, bound)
    b = jax.random.uniform(kb, (C_out,), jnp.float32, -bound, bound)

    out = contracting_block(x, w, b)
    out = jax.block_until_ready(out)

    # Pure-JAX f32 reference: reflect-pad conv (stride 2) + bias -> InstanceNorm2d -> ReLU.
    xp = jnp.pad(x, ((0, 0), (0, 0), (1, 1), (1, 1)), mode="reflect")
    y = jax.lax.conv_general_dilated(
        xp, w, window_strides=(2, 2), padding="VALID",
        dimension_numbers=("NCHW", "OIHW", "NCHW"),
        precision=jax.lax.Precision.HIGHEST,
    ) + b[None, :, None, None]
    mean = y.mean(axis=(2, 3), keepdims=True)
    var = ((y - mean) ** 2).mean(axis=(2, 3), keepdims=True)
    ref = jnp.maximum((y - mean) * jax.lax.rsqrt(var + EPS), 0.0)

    assert out.shape == (N, C_out, H // 2, W // 2)
    # Kernel uses bf16 conv inputs with f32 accumulation (per perf review); tolerance
    # vs. the all-f32 HIGHEST reference reflects that intentional input quantization.
    assert jnp.allclose(out, ref, atol=2e-2, rtol=2e-2), float(jnp.max(jnp.abs(out - ref)))

    print("KERNEL_OK")
</pallas_src>

<mosaic_0001>
module attributes {stable_mosaic.version = 11 : i64} {
  func.func @contracting_block_kernel(%arg0: i32, %arg1: memref<1x36x64xbf16, #tpu.memory_space<vmem>>, %arg2: memref<8x36xbf16, #tpu.memory_space<vmem>>, %arg3: memref<1x8x64xf32, #tpu.memory_space<vmem>>) attributes {dimension_semantics = [#tpu.dimension_semantics<parallel>], iteration_bounds = array<i64: 2>, scalar_prefetch = 0 : i64, scratch_operands = 0 : i64, tpu.core_type = #tpu.core_type<tc>, window_params = [{transform_indices = @transform_0, window_bounds = array<i64: 1, 36, 64>}, {pipeline_mode = #tpu.pipeline_mode<synchronous>, transform_indices = @transform_1, window_bounds = array<i64: 8, 36>}, {transform_indices = @transform_2, window_bounds = array<i64: 1, 8, 64>}]} {
    %c0 = arith.constant 0 : index
    %c0_0 = arith.constant 0 : index
    %0 = vector.load %arg2[%c0, %c0_0] : memref<8x36xbf16, #tpu.memory_space<vmem>>, vector<8x36xbf16>
    %c0_1 = arith.constant 0 : index
    %c0_2 = arith.constant 0 : index
    %c0_3 = arith.constant 0 : index
    %1 = vector.load %arg1[%c0_1, %c0_2, %c0_3] : memref<1x36x64xbf16, #tpu.memory_space<vmem>>, vector<1x36x64xbf16>
    %2 = vector.shape_cast %1 : vector<1x36x64xbf16> to vector<36x64xbf16>
    %cst = arith.constant dense<0.000000e+00> : vector<8x64xf32>
    %3 = tpu.matmul %0, %2, %cst {dimension_numbers = #tpu.dot_dimension_numbers<[1], [0], [0], [1], [0, 0, 1, 1], [], []>} : vector<8x36xbf16>, vector<36x64xbf16>, vector<8x64xf32> -> vector<8x64xf32>
    %cst_4 = arith.constant dense<0.000000e+00> : vector<8xf32>
    %4 = vector.multi_reduction <add>, %3, %cst_4 [1] : vector<8x64xf32> to vector<8xf32>
    %5 = vector.shape_cast %4 : vector<8xf32> to vector<8x1xf32>
    %cst_5 = arith.constant 6.400000e+01 : f32
    %6 = vector.broadcast %cst_5 : f32 to vector<8x1xf32>
    %7 = arith.divf %5, %6 : vector<8x1xf32>
    %8 = vector.broadcast %7 : vector<8x1xf32> to vector<8x64xf32>
    %9 = arith.subf %3, %8 : vector<8x64xf32>
    %10 = arith.mulf %9, %9 : vector<8x64xf32>
    %cst_6 = arith.constant dense<0.000000e+00> : vector<8xf32>
    %11 = vector.multi_reduction <add>, %10, %cst_6 [1] : vector<8x64xf32> to vector<8xf32>
    %12 = vector.shape_cast %11 : vector<8xf32> to vector<8x1xf32>
    %cst_7 = arith.constant 6.400000e+01 : f32
    %13 = vector.broadcast %cst_7 : f32 to vector<8x1xf32>
    %14 = arith.divf %12, %13 : vector<8x1xf32>
    %cst_8 = arith.constant 9.99999974E-6 : f32
    %15 = vector.broadcast %cst_8 : f32 to vector<8x1xf32>
    %16 = arith.addf %14, %15 : vector<8x1xf32>
    %17 = math.rsqrt %16 : vector<8x1xf32>
    %18 = vector.broadcast %17 : vector<8x1xf32> to vector<8x64xf32>
    %19 = arith.mulf %9, %18 : vector<8x64xf32>
    %cst_9 = arith.constant 0.000000e+00 : f32
    %20 = vector.broadcast %cst_9 : f32 to vector<8x64xf32>
    %21 = arith.maximumf %19, %20 : vector<8x64xf32>
    %c0_10 = arith.constant 0 : index
    %c0_11 = arith.constant 0 : index
    %c0_12 = arith.constant 0 : index
    %22 = vector.load %arg3[%c0_10, %c0_11, %c0_12] : memref<1x8x64xf32, #tpu.memory_space<vmem>>, vector<1x8x64xf32>
    %23 = vector.shape_cast %22 : vector<1x8x64xf32> to vector<8x64xf32>
    %24 = vector.shape_cast %21 : vector<8x64xf32> to vector<1x8x64xf32>
    tpu.vector_store %arg3[%c0_10, %c0_11, %c0_12], %24 {strides = array<i32>} : memref<1x8x64xf32, #tpu.memory_space<vmem>>, vector<1x8x64xf32>,
    return
  }
  func.func @transform_0(%arg0: i32) -> (i32, i32, i32) {
    %c0_i32 = arith.constant 0 : i32
    %c0_i32_0 = arith.constant 0 : i32
    %c0_i32_1 = arith.constant 0 : i32
    return %arg0, %c0_i32, %c0_i32_0 : i32, i32, i32
  }
  func.func @transform_1(%arg0: i32) -> (i32, i32) {
    %c0_i32 = arith.constant 0 : i32
    %c0_i32_0 = arith.constant 0 : i32
    %c0_i32_1 = arith.constant 0 : i32
    return %c0_i32, %c0_i32_0 : i32, i32
  }
  func.func @transform_2(%arg0: i32) -> (i32, i32, i32) {
    %c0_i32 = arith.constant 0 : i32
    %c0_i32_0 = arith.constant 0 : i32
    %c0_i32_1 = arith.constant 0 : i32
    return %arg0, %c0_i32, %c0_i32_0 : i32, i32, i32
  }
}

</mosaic_0001>

<llo_original>
// kernel: tpu_custom_call.1
$region0: #{tpu_custom_call.1}
  #allocation0 [shape = 'u32[]', space=smem, size = 0x4, offset = 0x4, fixed_abs, tag = 'smem constant byte address 0x4 - core index']
  #allocation1 [shape = 'u32[144,128]{1,0:T(1,128)}', space=vmem, size = 0x12000, scoped, tag = 'internal scratch']
  %s0 = inlined_call_operand.vmem [shape: bf16[2,36,64], index: 0, kind: input, shape index: {}]
  %s1 = inlined_call_operand.vmem [shape: bf16[8,36], index: 1, kind: input, shape index: {}]
  %s2 = inlined_call_operand.hbm [shape: f32[2,8,64], index: 2, kind: output, shape index: {}]
  %s3 = sld [smem:[#allocation0]]
  $region41: #{tpu_custom_call.1} parent=0
    _
  %s5 = ssub.s32 1, %s3
  %s6 = scalar_select 0, %s5, %s3
  $region1: #{tpu_custom_call.1} parent=0
    #allocation2 [shape = 'u8[8192]{0}', space=vmem, size = 0x2000, scoped, tag = 'output window, operand 0']
    #allocation3 [shape = 's32[2]{0}', space=sflag, size = 0x8, scoped, tag = 'scoped memory for tpu_custom_call.1']
    %7 = vsyncpa [#allocation3], 0
    %s8 = scalar_lea.sflag [#allocation3], 1
    %9 = vsyncpa %s8, 0
    loop: start=0, step=1, limit=4
    $region2: #{tpu_custom_call.1} parent=1 // loop_pre_header
      _
    $region3: #{tpu_custom_call.1} parent=1 // loop_header
      %s11 = sphi 0, %s15
      %p12 = scmp.ge.s32.totalorder %s11, 4
      %s21 = sphi 0, %s23
      %s24 = sphi 0, %s21
      %s25 = sphi 0, %s24
      %s41 = sphi 0, %s25
      %s45 = sphi 0, %s45
      %s47 = sphi 0, %s45
      %s48 = sphi 0, %s47
      %s62 = sphi 0, %s48
      %s68 = sphi 0, %s70
      %s71 = sphi 0, %s68
      %s72 = sphi 0, %s71
      %s88 = sphi 0, %s72
    $region4: #{tpu_custom_call.1} parent=1 // loop_header_branch
      %14 = sbr.rel (%p12) target = $region8
    $region5: #{tpu_custom_call.1} parent=1 // loop_body
      %s16 = ssub.s32 %s11, 1
      %s17 = ssub.s32 %s11, 2
      %s18 = sadd.s32 %s11, 1
      %s19 = ssub.s32 %s11, %s18
      %p20 = scmp.eq.s32.totalorder %s19, 0
      %s22 = sadd.s32 %s21, 1
      %s23 = scalar_select %p20, %s21, %s22
      %p26 = pneg %p20
      %p27 = scmp.eq.s32.totalorder %s11, 1
      %p28 = por %p26, %p27
      %p29 = scmp.ne.s32.totalorder %s21, %s24
      %p30 = scmp.eq.s32.totalorder %s11, 0
      %p31 = por %p29, %p30
      %p32 = scmp.ne.s32.totalorder %s21, %s24
      %p33 = scmp.eq.s32.totalorder %s16, 1
      %p34 = por %p32, %p33
      %p35 = scmp.ne.s32.totalorder %s24, %s25
      %p36 = scmp.eq.s32.totalorder %s16, 0
      %p37 = por %p35, %p36
      %p38 = scmp.ne.s32.totalorder %s24, %s25
      %p39 = scmp.eq.s32.totalorder %s17, 1
      %p40 = por %p38, %p39
      %p42 = scmp.ne.s32.totalorder %s25, %s41
      %p43 = scmp.eq.s32.totalorder %s17, 0
      %p44 = por %p42, %p43
      %s46 = sadd.s32 %s45, 1
      %p49 = scmp.eq.s32.totalorder %s11, 1
      %p50 = scmp.ne.s32.totalorder %s45, %s47
      %p51 = scmp.eq.s32.totalorder %s11, 0
      %p52 = por %p50, %p51
      %p53 = scmp.ne.s32.totalorder %s45, %s47
      %p54 = scmp.eq.s32.totalorder %s16, 1
      %p55 = por %p53, %p54
      %p56 = scmp.ne.s32.totalorder %s47, %s48
      %p57 = scmp.eq.s32.totalorder %s16, 0
      %p58 = por %p56, %p57
      %p59 = scmp.ne.s32.totalorder %s47, %s48
      %p60 = scmp.eq.s32.totalorder %s17, 1
      %p61 = por %p59, %p60
      %p63 = scmp.ne.s32.totalorder %s48, %s62
      %p64 = scmp.eq.s32.totalorder %s17, 0
      %p65 = por %p63, %p64
      %s66 = ssub.s32 %s11, %s18
      %p67 = scmp.eq.s32.totalorder %s66, 0
      %s69 = sadd.s32 %s68, 1
      %s70 = scalar_select %p67, %s68, %s69
      %p73 = pneg %p67
      %p74 = scmp.eq.s32.totalorder %s11, 1
      %p75 = por %p73, %p74
      %p76 = scmp.ne.s32.totalorder %s68, %s71
      %p77 = scmp.eq.s32.totalorder %s11, 0
      %p78 = por %p76, %p77
      %p79 = scmp.ne.s32.totalorder %s68, %s71
      %p80 = scmp.eq.s32.totalorder %s16, 1
      %p81 = por %p79, %p80
      %p82 = scmp.ne.s32.totalorder %s71, %s72
      %p83 = scmp.eq.s32.totalorder %s16, 0
      %p84 = por %p82, %p83
      %p85 = scmp.ne.s32.totalorder %s71, %s72
      %p86 = scmp.eq.s32.totalorder %s17, 1
      %p87 = por %p85, %p86
      %p89 = scmp.ne.s32.totalorder %s72, %s88
      %p90 = scmp.eq.s32.totalorder %s17, 0
      %p91 = por %p89, %p90
      %p92 = scmp.le.s32.totalorder 1, %s11
      %p93 = scmp.lt.s32.totalorder %s11, 3
      %p94 = pnand %p92, %p93
      %p95 = pneg %p94
      // Predicated region
      $region9: #{tpu_custom_call.1} parent=5 // pred_check
        _
      $region10: #{tpu_custom_call.1} parent=5 // pred_check_branch
        %97 = sbr.rel (%p94) target = $region12
      $region11: #{tpu_custom_call.1} parent=5 // pred_region
        %s98 = ssub.s32 %s11, 1
        // Predicated region
        $region13: #{tpu_custom_call.1} parent=11 // pred_check
          %p99 = pneg %p58
        $region14: #{tpu_custom_call.1} parent=11 // pred_check_branch
          %101 = sbr.rel (%p99) target = $region16
        $region15: #{tpu_custom_call.1} parent=11 // pred_region
          _
        $region16: #{tpu_custom_call.1} parent=11 // pred_fallthru
          _
      $region12: #{tpu_custom_call.1} parent=5 // pred_fallthru
        _
      %p102 = scmp.lt.s32.totalorder %s11, 2
      // Predicated region
      $region17: #{tpu_custom_call.1} parent=5 // pred_check
        %p103 = pneg %p102
      $region18: #{tpu_custom_call.1} parent=5 // pred_check_branch
        %105 = sbr.rel (%p103) target = $region20
      $region19: #{tpu_custom_call.1} parent=5 // pred_region
        // Predicated region
        $region21: #{tpu_custom_call.1} parent=19 // pred_check
          %p106 = pneg %p31
        $region22: #{tpu_custom_call.1} parent=19 // pred_check_branch
          %108 = sbr.rel (%p106) target = $region24
        $region23: #{tpu_custom_call.1} parent=19 // pred_region
          %p109 = scmp.lt.s32.totalorder %s11, 1
          %s110 = scalar_select %p109, %s11, 1
          %s111 = smul.addr %s110, 5
          %s112 = smul.addr %s111, 4
          %s113 = scalar_lea.vmem %s0, %s112
        $region24: #{tpu_custom_call.1} parent=19 // pred_fallthru
          _
      $region20: #{tpu_custom_call.1} parent=5 // pred_fallthru
        _
      %p114 = scmp.le.s32.totalorder 1, %s11
      %p115 = scmp.lt.s32.totalorder %s11, 3
      %p116 = pnand %p114, %p115
      %p117 = pneg %p116
      // Predicated region
      $region25: #{tpu_custom_call.1} parent=5 // pred_check
        _
      $region26: #{tpu_custom_call.1} parent=5 // pred_check_branch
        %119 = sbr.rel (%p116) target = $region28
      $region27: #{tpu_custom_call.1} parent=5 // pred_region
        %s120 = ssub.s32 %s11, 1
        %p121 = scmp.lt.s32.totalorder %s16, 1
        %s122 = scalar_select %p121, %s16, 1
        %s123 = smul.addr %s122, 5
        %s124 = smul.addr %s123, 4
        %s125 = scalar_lea.vmem %s0, %s124
        %p126 = pneg %p37
        %p127 = pneg %p34
        %p128 = pneg %p58
        %p129 = pneg %p55
        %p130 = pneg %p84
        %p131 = pneg %p81
        %s132 = sand.u32 %s71, 1
        %s133 = scalar_lea.sflag [#allocation3], %s132
        %s134 = sand.u32 %s71, 1
        %s135 = smul.addr %s134, 8
        %s136 = scalar_lea.vmem [#allocation2], %s135
        %p137 = scmp.lt.s32.totalorder %s16, 1
        %s138 = scalar_select %p137, %s16, 1
        %s139 = smul.addr %s138, 5
        %s140 = smul.addr %s139, 4
        %s141 = scalar_lea.vmem %s0, %s140
        %v143 = vld [vmem:[%s1] sm:$0xf]
        %v144 = vld [vmem:[%s141] sm:$0xf]
        %v145 = vld [vmem:[%s141 + $0x4] sm:$0xf]
        %v146 = vld [vmem:[%s141 + $0x8] sm:$0xf]
        %v147 = vld [vmem:[%s141 + $0xc] sm:$0xf]
        %v148 = vld [vmem:[%s141 + $0x10] sm:$0x3]
        %v154 = vunpack.c.l.b16 %v144
        %v155 = vunpack.c.l.b16 %v145
        %v156 = vunpack.c.l.b16 %v146
        %v157 = vunpack.c.l.b16 %v147
        %v158 = vunpack.c.l.b16 %v148
        %v159 = vpack.c.b16 %v155, %v154
        %v160 = vpack.c.b16 %v157, %v156
        %v161 = vpack.c.b16 %v158, %v158
        %vm164 = vcmask 293888
        %v166 = vsel %vm164, %v143, 0
        %vm168 = vcmask 1041408
        %v170 = vsel %vm168, %v161, 0
        %172 = vmatprep.subr.bf16.mxu0 0
        %173 = vmatpush1.bf16.msra.mxu0 %v159
        %174 = vmatprep.subr.bf16.mxu0 0
        %175 = vmatpush1.bf16.msra.mxu0 %v160
        %176 = vmatprep.subr.bf16.mxu0 0
        %177 = vmatpush1.bf16.msra.mxu0 %v170
        %178 = vmatprep.subr.bf16.mxu0 0
        %179 = vmatpush1.bf16.msra.mxu0 0
        %180 = vmatprep.subr.bf16.mxu0 0
        %181 = vmatpush1.bf16.msra.mxu0 0
        %182 = vmatprep.subr.bf16.mxu0 0
        %183 = vmatpush1.bf16.msra.mxu0 0
        %184 = vmatprep.subr.bf16.mxu0 0
        %185 = vmatpush1.bf16.msra.mxu0 0
        %186 = vmatprep.subr.bf16.mxu0 0
        %187 = vmatpush1.bf16.msra.mxu0 0
        %188 = vmatprep.subr.bf16.mxu0 0
        %189 = vmatpush1.bf16.msra.mxu0 0
        %190 = vmatprep.subr.bf16.mxu0 0
        %191 = vmatpush1.bf16.msra.mxu0 0
        %192 = vmatprep.subr.bf16.mxu0 0
        %193 = vmatpush1.bf16.msra.mxu0 0
        %194 = vmatprep.subr.bf16.mxu0 0
        %195 = vmatpush1.bf16.msra.mxu0 0
        %196 = vmatprep.subr.bf16.mxu0 0
        %197 = vmatpush1.bf16.msra.mxu0 0
        %198 = vmatprep.subr.bf16.mxu0 0
        %199 = vmatpush1.bf16.msra.mxu0 0
        %200 = vmatprep.subr.bf16.mxu0 0
        %201 = vmatpush1.bf16.msra.mxu0 0
        %202 = vmatprep.subr.bf16.mxu0 0
        %203 = vmatpush1.bf16.msra.mxu0 0
        %204 = vmatprep.mubr.bf16.mxu0 0
        %205 = vmatmul.mubr.bf16.gmra.mrb[0].mxu0 %v166
        %v206 = vpop.f32.mrb[0].mxu0
        %v207 = vadd.f32 0.0, %v206
        %v208 = vpop.f32.mrb[0].mxu0
        %v209 = vpop.f32.mrb[0].mxu0
        %v210 = vpop.f32.mrb[0].mxu0
        %211 = vdwg.mxu0
        %vm212 = vcmask 523264
        %v213 = vsel %vm212, %v207, 0.0
        %214 = vadd.xlane.f32.xlu0 %v213
        %v215 = vpop.xlane.xlu0 %214
        %v216 = vrcp.pop 64.0
        %v217 = vmul.f32 %v215, %v216
        %v218 = vsub.f32 %v207, %v217
        %v219 = vmul.f32 %v218, %v218
        %v220 = vsel %vm212, %v219, 0.0
        %221 = vadd.xlane.f32.xlu0 %v220
        %v222 = vpop.xlane.xlu0 %221
        %v223 = vmul.f32 %v222, %v216
        %v224 = vadd.f32 %v223, 1e-05
        %v225 = vrsqrt.pop %v224
        %v226 = vmul.f32 %v218, %v225
        %v227 = vmax.f32 %v226, 0.0
        %228 = vst.msk [vmem:[%s136] sm:$0xff] %vm212, %v227
        %s229 = sand.u32 %s71, 1
        %s230 = scalar_lea.sflag [#allocation3], %s229
        %s231 = sand.u32 %s71, 1
        %s232 = smul.addr %s231, 8
        %s233 = scalar_lea.vmem [#allocation2], %s232
        // Predicated region
        $region29: #{tpu_custom_call.1} parent=27 // pred_check
          %p234 = pneg %p81
        $region30: #{tpu_custom_call.1} parent=27 // pred_check_branch
          %236 = sbr.rel (%p234) target = $region32
        $region31: #{tpu_custom_call.1} parent=27 // pred_region
          %s238 = ssub.s32 128, 128
          %239 = vsyncadd %s230, %s238
          %s240 = smul.addr %s16, 128
          %s241 = scalar_lea.hbm %s2, %s240
          %s243 = sshll.u32 %s233, 4
          %s244 = int_to_ptr.vmem [resolvable:$true] %s243
          %246 = dma.vmem_to_hbm [thread:$0]  %s244, 128, %s241, %s230
        $region32: #{tpu_custom_call.1} parent=27 // pred_fallthru
          _
      $region28: #{tpu_custom_call.1} parent=5 // pred_fallthru
        _
      %p247 = scmp.le.s32.totalorder 2, %s11
      // Predicated region
      $region33: #{tpu_custom_call.1} parent=5 // pred_check
        %p248 = pneg %p247
      $region34: #{tpu_custom_call.1} parent=5 // pred_check_branch
        %250 = sbr.rel (%p248) target = $region36
      $region35: #{tpu_custom_call.1} parent=5 // pred_region
        %s251 = ssub.s32 %s11, 2
        // Predicated region
        $region37: #{tpu_custom_call.1} parent=35 // pred_check
          %p252 = pneg %p87
        $region38: #{tpu_custom_call.1} parent=35 // pred_check_branch
          %254 = sbr.rel (%p252) target = $region40
        $region39: #{tpu_custom_call.1} parent=35 // pred_region
          %s255 = sand.u32 %s72, 1
          %s256 = scalar_lea.sflag [#allocation3], %s255
          %s257 = sand.u32 %s72, 1
          %s258 = smul.addr %s257, 8
          %s259 = scalar_lea.vmem [#allocation2], %s258
          %260 = dma.done %s256, 128
        $region40: #{tpu_custom_call.1} parent=35 // pred_fallthru
          _
      $region36: #{tpu_custom_call.1} parent=5 // pred_fallthru
        _
    $region6: #{tpu_custom_call.1} parent=1 // loop_footer
      %s15 = sadd.s32 1, %s11
    $region7: #{tpu_custom_call.1} parent=1 // loop_footer_branch
      %10 = sbr.rel target = $region3
    $region8: #{tpu_custom_call.1} parent=1 // loop_exit
      _
    %261 = vsyncpa [#allocation3], 1
    %s262 = scalar_lea.sflag [#allocation3], 1
    %263 = vsyncpa %s262, 1

</llo_original>
